<compile_context>
chip_gen: v5e
topology: v5e:2x2
jax: 0.10.0
libtpu: 0.0.40
codegen_flags: <defaults>
</compile_context>

<pallas_src>
import jax
import jax.numpy as jnp
from jax.experimental import pallas as pl
from jax.experimental.pallas import tpu as pltpu


def _make_kernel(s_total, s_tile, c, acc_lanes, group, num_s):
    needs_mask = (s_total % s_tile) != 0
    n_chunks = max(1, s_tile // acc_lanes)   # acc_lanes == s_tile when ragged-single
    inv_s = 1.0 / float(s_total)
    neg_inf = float("-inf")

    def kernel(x_ref, w1t_ref, w2t_ref, out_ref, sum_ref, max_ref):
        # x_ref: (1, C, TS)   w1t_ref: (C, H)   w2t_ref: (H, C)
        # out_ref: (1, 1, C)  sum_ref/max_ref: (1, C, acc_lanes) f32 scratch
        s = pl.program_id(1)

        @pl.when(s == 0)
        def _init():
            sum_ref[...] = jnp.zeros_like(sum_ref)
            max_ref[...] = jnp.full_like(max_ref, neg_inf)

        def accumulate(masked):
            # Channel groups keep the register-resident partials small; lane
            # chunks keep scratch traffic to one small RMW per group per step.
            for g0 in range(0, c, group):
                g1 = min(g0 + group, c)
                ps = None
                pm = None
                for k in range(n_chunks):
                    off = k * acc_lanes
                    raw = x_ref[:, g0:g1, off:off + acc_lanes].astype(jnp.float32)
                    if masked:
                        lane = jax.lax.broadcasted_iota(jnp.int32, raw.shape, 2)
                        valid = (s * s_tile + off + lane) < s_total
                        vs = jnp.where(valid, raw, 0.0)
                        vm = jnp.where(valid, raw, neg_inf)
                    else:
                        vs = raw
                        vm = raw
                    ps = vs if ps is None else ps + vs
                    pm = vm if pm is None else jnp.maximum(pm, vm)
                sum_ref[:, g0:g1, :] += ps
                max_ref[:, g0:g1, :] = jnp.maximum(max_ref[:, g0:g1, :], pm)

        if not needs_mask:
            accumulate(False)
        else:
            if num_s > 1:
                @pl.when(s < num_s - 1)
                def _body_main():
                    accumulate(False)

            @pl.when(s == num_s - 1)
            def _body_tail():
                accumulate(True)

        @pl.when(s == num_s - 1)
        def _finalize():
            avg = jnp.sum(sum_ref[...], axis=-1) * inv_s        # (1, C) f32
            mx = jnp.max(max_ref[...], axis=-1)                  # (1, C) f32
            pooled = jnp.concatenate([avg, mx], axis=0)          # (2, C)
            w1t = w1t_ref[...].astype(jnp.float32)               # (C, H)
            w2t = w2t_ref[...].astype(jnp.float32)               # (H, C)
            h = jnp.dot(pooled, w1t, preferred_element_type=jnp.float32)
            h = jnp.maximum(h, 0.0)                               # ReLU
            y = jnp.dot(h, w2t, preferred_element_type=jnp.float32)   # (2, C)
            att = jax.nn.sigmoid(y[0:1, :] + y[1:2, :])           # (1, C)
            out_ref[...] = att.reshape(out_ref.shape).astype(out_ref.dtype)

    return kernel


def _choose_spatial_tile(s, c, itemsize, target_bytes=8 * 1024 * 1024):
    # ~8 MiB input blocks: at v7x's 3.2 TB/s a tile DMA is ~2.5 us vs ~0.35 us
    # per-step pipeline overhead; double-buffered it is still tiny vs VMEM now
    # that the accumulators are fixed-width.
    if c * s * itemsize <= target_bytes:
        return int(s)
    ts = (target_bytes // (c * itemsize)) // 128 * 128
    return int(max(128, min(ts, s)))


def _choose_channel_group(c, acc_lanes):
    # Keep each register-resident partial accumulator at <= ~16 vregs.
    acc_vregs_per_8ch = (acc_lanes + 127) // 128
    g = max(8, (16 // max(1, acc_vregs_per_8ch)) * 8)
    return int(min(c, min(g, 64)))


def _physical_vmem_bytes():
    try:
        return int(pltpu.get_tpu_info().vmem_capacity_bytes)
    except Exception:
        return 64 << 20    # conservative (v7x per-TC)


def channel_attention(x, w1, w2, *, spatial_tile=None):
    """x: (N, C, *spatial); w1: fc1.weight (H, C); w2: fc2.weight (C, H).

    Returns sigmoid(fc2(relu(fc1(avgpool(x)))) + fc2(relu(fc1(maxpool(x)))))
    with shape (N, C, 1, ..., 1), matching the PyTorch ChannelAttention module.
    """
    n, c = x.shape[0], x.shape[1]
    spatial_rank = x.ndim - 2
    hidden = w1.shape[0]
    x_flat = x.reshape(n, c, -1)                  # (N, C, S)
    s_total = x_flat.shape[-1]

    ts = spatial_tile if spatial_tile is not None else _choose_spatial_tile(
        s_total, c, x_flat.dtype.itemsize)
    if ts != s_total and ts % 128 != 0:
        raise ValueError("spatial tile must be a multiple of 128 or cover all of S")
    num_s = pl.cdiv(s_total, ts)
    acc_lanes = 128 if ts % 128 == 0 else ts
    group = _choose_channel_group(c, acc_lanes)

    kernel = _make_kernel(s_total, ts, c, acc_lanes, group, num_s)

    # Advisory cost: one streaming pass over x, tiny MLP + sigmoid per n.
    cost = pl.CostEstimate(
        flops=2 * n * c * s_total + 8 * n * c * hidden,
        transcendentals=n * c,
        bytes_accessed=(x_flat.size * x_flat.dtype.itemsize
                        + (w1.size + w2.size) * w1.dtype.itemsize
                        + n * c * x.dtype.itemsize),
    )

    # VMEM budget: 2x (double-buffered) input tile + resident weights (count 2x
    # to be safe) + 1x scratch slabs + headroom; cap at 80% of physical VMEM.
    c_pad = -(-c // 8) * 8
    ts_pad = -(-ts // 128) * 128
    h_pad = -(-hidden // 8) * 8
    tile_bytes = c_pad * ts_pad * x_flat.dtype.itemsize
    w_bytes = (c_pad * (-(-hidden // 128) * 128)
               + h_pad * (-(-c // 128) * 128)) * w1.dtype.itemsize
    acc_pad = -(-acc_lanes // 128) * 128
    scratch_bytes = 2 * c_pad * acc_pad * 4
    request = 2 * tile_bytes + 2 * w_bytes + scratch_bytes + (4 << 20)
    cap = int(_physical_vmem_bytes() * 0.8)
    vmem_limit = int(min(cap, max(32 << 20, request)))

    # Note: pipeline_mode=pl.Buffered(3) on the x spec is a candidate few-%
    # win (sweep 2 vs 3); left at the default depth here.
    out = pl.pallas_call(
        kernel,
        out_shape=jax.ShapeDtypeStruct((n, 1, c), x.dtype),
        grid=(n, num_s),
        in_specs=[
            pl.BlockSpec((1, c, ts), lambda i, s: (i, 0, s)),     # x tiles
            pl.BlockSpec((c, hidden), lambda i, s: (0, 0)),       # w1.T (resident)
            pl.BlockSpec((hidden, c), lambda i, s: (0, 0)),       # w2.T (resident)
        ],
        out_specs=pl.BlockSpec((1, 1, c), lambda i, s: (i, 0, 0)),
        scratch_shapes=[
            pltpu.VMEM((1, c, acc_lanes), jnp.float32),   # running sum
            pltpu.VMEM((1, c, acc_lanes), jnp.float32),   # running max
        ],
        compiler_params=pltpu.CompilerParams(
            dimension_semantics=("parallel", "arbitrary"),
            vmem_limit_bytes=vmem_limit,
        ),
        cost_estimate=cost,
    )(x_flat, jnp.transpose(w1), jnp.transpose(w2))

    return out.reshape((n, c) + (1,) * spatial_rank)


def _reference(x, w1, w2):
    n, c = x.shape[0], x.shape[1]
    xf = x.reshape(n, c, -1).astype(jnp.float32)
    avg = jnp.mean(xf, axis=-1)
    mx = jnp.max(xf, axis=-1)

    def mlp(p):
        h = jnp.maximum(p @ w1.astype(jnp.float32).T, 0.0)
        return h @ w2.astype(jnp.float32).T

    out = jax.nn.sigmoid(mlp(avg) + mlp(mx))
    return out.reshape((n, c) + (1,) * (x.ndim - 2)).astype(x.dtype)


if __name__ == "__main__":
    key = jax.random.PRNGKey(0)
    k_x, k_w1, k_w2, k_y, k_z, k_w3, k_w4 = jax.random.split(key, 7)

    # dim = 3 (module default): NCDHW input, in_planes=4 -> hidden_planes=4.
    N, C, D, Hs, Ws = 2, 4, 8, 8, 8
    hidden = C // 16 if C // 16 > 1 else C                      # -> 4
    x = jax.random.normal(k_x, (N, C, D, Hs, Ws), dtype=jnp.float32)
    # fc1: Conv3d(in_planes, hidden, 1, bias=False) -> weight (hidden, in_planes)
    # fc2: Conv3d(hidden, in_planes, 1, bias=False) -> weight (in_planes, hidden)
    w1 = jax.random.normal(k_w1, (hidden, C), dtype=jnp.float32) * 0.5
    w2 = jax.random.normal(k_w2, (C, hidden), dtype=jnp.float32) * 0.5

    out = jax.block_until_ready(channel_attention(x, w1, w2))
    ref = _reference(x, w1, w2)
    assert out.shape == (N, C, 1, 1, 1), out.shape
    assert jnp.allclose(out, ref, atol=1e-5, rtol=1e-5), "3D case mismatch"

    # Multi-step reduction with a ragged tail (dim=1, S=200, tile=128 -> 2 steps,
    # masked path only on the last step).
    y = jax.random.normal(k_y, (N, C, 200), dtype=jnp.float32)
    out1 = jax.block_until_ready(channel_attention(y, w1, w2, spatial_tile=128))
    ref1 = _reference(y, w1, w2)
    assert out1.shape == (N, C, 1), out1.shape
    assert jnp.allclose(out1, ref1, atol=1e-5, rtol=1e-5), "ragged 1D mismatch"

    # Larger channel count exercising the channel-group loop (dim=2, S=384,
    # 3 unmasked steps, groups [0:64] and [64:96]).
    C2 = 96
    hidden2 = C2 // 16 if C2 // 16 > 1 else C2                  # -> 6
    z = jax.random.normal(k_z, (N, C2, 16, 24), dtype=jnp.float32)
    w3 = jax.random.normal(k_w3, (hidden2, C2), dtype=jnp.float32) * 0.2
    w4 = jax.random.normal(k_w4, (C2, hidden2), dtype=jnp.float32) * 0.2
    out2 = jax.block_until_ready(channel_attention(z, w3, w4, spatial_tile=128))
    ref2 = _reference(z, w3, w4)
    assert out2.shape == (N, C2, 1, 1), out2.shape
    assert jnp.allclose(out2, ref2, atol=1e-5, rtol=1e-5), "2D multi-step mismatch"

    print("KERNEL_OK")
</pallas_src>

<mosaic_0001>
module attributes {stable_mosaic.version = 11 : i64} {
  func.func @kernel(%arg0: i32, %arg1: i32, %arg2: memref<1x4x512xf32, #tpu.memory_space<vmem>>, %arg3: memref<4x4xf32, #tpu.memory_space<vmem>>, %arg4: memref<4x4xf32, #tpu.memory_space<vmem>>, %arg5: memref<1x1x4xf32, #tpu.memory_space<vmem>>, %arg6: memref<1x4x128xf32, #tpu.memory_space<vmem>>, %arg7: memref<1x4x128xf32, #tpu.memory_space<vmem>>) attributes {dimension_semantics = [#tpu.dimension_semantics<parallel>, #tpu.dimension_semantics<arbitrary>], iteration_bounds = array<i64: 2, 1>, scalar_prefetch = 0 : i64, scratch_operands = 2 : i64, tpu.core_type = #tpu.core_type<tc>, window_params = [{transform_indices = @transform_0, window_bounds = array<i64: 1, 4, 512>}, {pipeline_mode = #tpu.pipeline_mode<synchronous>, transform_indices = @transform_1, window_bounds = array<i64: 4, 4>}, {pipeline_mode = #tpu.pipeline_mode<synchronous>, transform_indices = @transform_2, window_bounds = array<i64: 4, 4>}, {transform_indices = @transform_3, window_bounds = array<i64: 1, 1, 4>}]} {
    %c0_i32 = arith.constant 0 : i32
    %0 = arith.cmpi eq, %arg1, %c0_i32 : i32
    %1 = arith.extui %0 : i1 to i32
    %c0_i32_0 = arith.constant 0 : i32
    %2 = arith.cmpi ne, %1, %c0_i32_0 : i32
    scf.if %2 {
      %cst = arith.constant 0.000000e+00 : f32
      %22 = vector.broadcast %cst : f32 to vector<1x4x128xf32>
      %c0_23 = arith.constant 0 : index
      %c0_24 = arith.constant 0 : index
      %c0_25 = arith.constant 0 : index
      %23 = vector.load %arg6[%c0_23, %c0_24, %c0_25] : memref<1x4x128xf32, #tpu.memory_space<vmem>>, vector<1x4x128xf32>
      tpu.vector_store %arg6[%c0_23, %c0_24, %c0_25], %22 {strides = array<i32>} : memref<1x4x128xf32, #tpu.memory_space<vmem>>, vector<1x4x128xf32>,
      %cst_26 = arith.constant 0xFF800000 : f32
      %24 = vector.broadcast %cst_26 : f32 to vector<1x4x128xf32>
      %c0_27 = arith.constant 0 : index
      %c0_28 = arith.constant 0 : index
      %c0_29 = arith.constant 0 : index
      %25 = vector.load %arg7[%c0_27, %c0_28, %c0_29] : memref<1x4x128xf32, #tpu.memory_space<vmem>>, vector<1x4x128xf32>
      tpu.vector_store %arg7[%c0_27, %c0_28, %c0_29], %24 {strides = array<i32>} : memref<1x4x128xf32, #tpu.memory_space<vmem>>, vector<1x4x128xf32>,
    } else {
    }
    %c0 = arith.constant 0 : index
    %c0_1 = arith.constant 0 : index
    %c0_2 = arith.constant 0 : index
    %3 = vector.load %arg2[%c0, %c0_1, %c0_2] : memref<1x4x512xf32, #tpu.memory_space<vmem>>, vector<1x4x128xf32>
    %c0_3 = arith.constant 0 : index
    %c0_4 = arith.constant 0 : index
    %c128 = arith.constant 128 : index
    %4 = vector.load %arg2[%c0_3, %c0_4, %c128] : memref<1x4x512xf32, #tpu.memory_space<vmem>>, vector<1x4x128xf32>
    %5 = arith.addf %3, %4 : vector<1x4x128xf32>
    %6 = arith.maximumf %3, %4 : vector<1x4x128xf32>
    %c0_5 = arith.constant 0 : index
    %c0_6 = arith.constant 0 : index
    %c256 = arith.constant 256 : index
    %7 = vector.load %arg2[%c0_5, %c0_6, %c256] : memref<1x4x512xf32, #tpu.memory_space<vmem>>, vector<1x4x128xf32>
    %8 = arith.addf %5, %7 : vector<1x4x128xf32>
    %9 = arith.maximumf %6, %7 : vector<1x4x128xf32>
    %c0_7 = arith.constant 0 : index
    %c0_8 = arith.constant 0 : index
    %c384 = arith.constant 384 : index
    %10 = vector.load %arg2[%c0_7, %c0_8, %c384] : memref<1x4x512xf32, #tpu.memory_space<vmem>>, vector<1x4x128xf32>
    %11 = arith.addf %8, %10 : vector<1x4x128xf32>
    %12 = arith.maximumf %9, %10 : vector<1x4x128xf32>
    %c0_9 = arith.constant 0 : index
    %c0_10 = arith.constant 0 : index
    %c0_11 = arith.constant 0 : index
    %13 = vector.load %arg6[%c0_9, %c0_10, %c0_11] : memref<1x4x128xf32, #tpu.memory_space<vmem>>, vector<1x4x128xf32>
    %14 = arith.addf %13, %11 : vector<1x4x128xf32>
    %c0_12 = arith.constant 0 : index
    %c0_13 = arith.constant 0 : index
    %c0_14 = arith.constant 0 : index
    %15 = vector.load %arg6[%c0_12, %c0_13, %c0_14] : memref<1x4x128xf32, #tpu.memory_space<vmem>>, vector<1x4x128xf32>
    tpu.vector_store %arg6[%c0_12, %c0_13, %c0_14], %14 {strides = array<i32>} : memref<1x4x128xf32, #tpu.memory_space<vmem>>, vector<1x4x128xf32>,
    %c0_15 = arith.constant 0 : index
    %c0_16 = arith.constant 0 : index
    %c0_17 = arith.constant 0 : index
    %16 = vector.load %arg7[%c0_15, %c0_16, %c0_17] : memref<1x4x128xf32, #tpu.memory_space<vmem>>, vector<1x4x128xf32>
    %17 = arith.maximumf %16, %12 : vector<1x4x128xf32>
    %c0_18 = arith.constant 0 : index
    %c0_19 = arith.constant 0 : index
    %c0_20 = arith.constant 0 : index
    %18 = vector.load %arg7[%c0_18, %c0_19, %c0_20] : memref<1x4x128xf32, #tpu.memory_space<vmem>>, vector<1x4x128xf32>
    tpu.vector_store %arg7[%c0_18, %c0_19, %c0_20], %17 {strides = array<i32>} : memref<1x4x128xf32, #tpu.memory_space<vmem>>, vector<1x4x128xf32>,
    %c0_i32_21 = arith.constant 0 : i32
    %19 = arith.cmpi eq, %arg1, %c0_i32_21 : i32
    %20 = arith.extui %19 : i1 to i32
    %c0_i32_22 = arith.constant 0 : i32
    %21 = arith.cmpi ne, %20, %c0_i32_22 : i32
    scf.if %21 {
      %c0_23 = arith.constant 0 : index
      %c0_24 = arith.constant 0 : index
      %c0_25 = arith.constant 0 : index
      %22 = vector.load %arg6[%c0_23, %c0_24, %c0_25] : memref<1x4x128xf32, #tpu.memory_space<vmem>>, vector<1x4x128xf32>
      %cst = arith.constant dense<0.000000e+00> : vector<1x4xf32>
      %23 = vector.multi_reduction <add>, %22, %cst [2] : vector<1x4x128xf32> to vector<1x4xf32>
      %cst_26 = arith.constant 0.001953125 : f32
      %24 = vector.broadcast %cst_26 : f32 to vector<1x4xf32>
      %25 = arith.mulf %23, %24 : vector<1x4xf32>
      %c0_27 = arith.constant 0 : index
      %c0_28 = arith.constant 0 : index
      %c0_29 = arith.constant 0 : index
      %26 = vector.load %arg7[%c0_27, %c0_28, %c0_29] : memref<1x4x128xf32, #tpu.memory_space<vmem>>, vector<1x4x128xf32>
      %cst_30 = arith.constant dense<0xFF800000> : vector<1x4xf32>
      %27 = vector.multi_reduction <maximumf>, %26, %cst_30 [2] : vector<1x4x128xf32> to vector<1x4xf32>
      %28 = tpu.concatenate %25, %27 in 0 : vector<1x4xf32>, vector<1x4xf32> -> vector<2x4xf32>
      %c0_31 = arith.constant 0 : index
      %c0_32 = arith.constant 0 : index
      %29 = vector.load %arg3[%c0_31, %c0_32] : memref<4x4xf32, #tpu.memory_space<vmem>>, vector<4x4xf32>
      %c0_33 = arith.constant 0 : index
      %c0_34 = arith.constant 0 : index
      %30 = vector.load %arg4[%c0_33, %c0_34] : memref<4x4xf32, #tpu.memory_space<vmem>>, vector<4x4xf32>
      %cst_35 = arith.constant dense<0.000000e+00> : vector<2x4xf32>
      %31 = tpu.matmul %28, %29, %cst_35 {dimension_numbers = #tpu.dot_dimension_numbers<[1], [0], [0], [1], [0, 0, 1, 1], [], []>} : vector<2x4xf32>, vector<4x4xf32>, vector<2x4xf32> -> vector<2x4xf32>
      %cst_36 = arith.constant 0.000000e+00 : f32
      %32 = vector.broadcast %cst_36 : f32 to vector<2x4xf32>
      %33 = arith.maximumf %31, %32 : vector<2x4xf32>
      %cst_37 = arith.constant dense<0.000000e+00> : vector<2x4xf32>
      %34 = tpu.matmul %33, %30, %cst_37 {dimension_numbers = #tpu.dot_dimension_numbers<[1], [0], [0], [1], [0, 0, 1, 1], [], []>} : vector<2x4xf32>, vector<4x4xf32>, vector<2x4xf32> -> vector<2x4xf32>
      %35 = vector.extract_strided_slice %34 {offsets = [0, 0], sizes = [1, 4], strides = [1, 1]} : vector<2x4xf32> to vector<1x4xf32>
      %36 = vector.extract_strided_slice %34 {offsets = [1, 0], sizes = [1, 4], strides = [1, 1]} : vector<2x4xf32> to vector<1x4xf32>
      %37 = arith.addf %35, %36 : vector<1x4xf32>
      %38 = arith.negf %37 : vector<1x4xf32>
      %39 = math.exp %38 : vector<1x4xf32>
      %cst_38 = arith.constant 1.000000e+00 : f32
      %40 = vector.broadcast %cst_38 : f32 to vector<1x4xf32>
      %41 = arith.addf %40, %39 : vector<1x4xf32>
      %42 = arith.divf %40, %41 : vector<1x4xf32>
      %43 = vector.shape_cast %42 : vector<1x4xf32> to vector<1x1x4xf32>
      %c0_39 = arith.constant 0 : index
      %c0_40 = arith.constant 0 : index
      %c0_41 = arith.constant 0 : index
      %44 = vector.load %arg5[%c0_39, %c0_40, %c0_41] : memref<1x1x4xf32, #tpu.memory_space<vmem>>, vector<1x1x4xf32>
      tpu.vector_store %arg5[%c0_39, %c0_40, %c0_41], %43 {strides = array<i32>} : memref<1x1x4xf32, #tpu.memory_space<vmem>>, vector<1x1x4xf32>,
    } else {
    }
    return
  }
  func.func @transform_0(%arg0: i32, %arg1: i32) -> (i32, i32, i32) {
    %c0_i32 = arith.constant 0 : i32
    %c0_i32_0 = arith.constant 0 : i32
    return %arg0, %c0_i32, %arg1 : i32, i32, i32
  }
  func.func @transform_1(%arg0: i32, %arg1: i32) -> (i32, i32) {
    %c0_i32 = arith.constant 0 : i32
    %c0_i32_0 = arith.constant 0 : i32
    %c0_i32_1 = arith.constant 0 : i32
    return %c0_i32, %c0_i32_0 : i32, i32
  }
  func.func @transform_2(%arg0: i32, %arg1: i32) -> (i32, i32) {
    %c0_i32 = arith.constant 0 : i32
    %c0_i32_0 = arith.constant 0 : i32
    %c0_i32_1 = arith.constant 0 : i32
    return %c0_i32, %c0_i32_0 : i32, i32
  }
  func.func @transform_3(%arg0: i32, %arg1: i32) -> (i32, i32, i32) {
    %c0_i32 = arith.constant 0 : i32
    %c0_i32_0 = arith.constant 0 : i32
    %c0_i32_1 = arith.constant 0 : i32
    return %arg0, %c0_i32, %c0_i32_0 : i32, i32, i32
  }
}

</mosaic_0001>

<llo_original>
// kernel: tpu_custom_call.1
$region0: #{tpu_custom_call.1}
  #allocation0 [shape = 'u32[]', space=smem, size = 0x4, offset = 0x4, fixed_abs, tag = 'smem constant byte address 0x4 - core index']
  #allocation1 [shape = 'u32[72,128]{1,0:T(1,128)}', space=vmem, size = 0x9000, scoped, tag = 'internal scratch']
  #allocation2 [shape = 'f32[1,4,128]{2,1,0:T(4,128)}', space=vmem, size = 0x800, scoped, tag = 'scratch operand']
  #allocation3 [shape = 'f32[1,4,128]{2,1,0:T(4,128)}', space=vmem, size = 0x800, scoped, tag = 'scratch operand']
  %s0 = inlined_call_operand.hbm [shape: f32[2,4,512], index: 0, kind: input, shape index: {}]
  %s1 = inlined_call_operand.hbm [shape: f32[4,4], index: 1, kind: input, shape index: {}]
  %s2 = inlined_call_operand.hbm [shape: f32[4,4], index: 2, kind: input, shape index: {}]
  %s3 = inlined_call_operand.hbm [shape: f32[2,1,4], index: 3, kind: output, shape index: {}]
  %s4 = sld [smem:[#allocation0]]
  $region65: #{tpu_custom_call.1} parent=0
    _
  %s6 = ssub.s32 1, %s4
  %s7 = scalar_select 0, %s6, %s4
  $region1: #{tpu_custom_call.1} parent=0
    #allocation4 [shape = 'u8[16384]{0}', space=vmem, size = 0x4000, scoped, tag = 'input window, operand 0']
    #allocation5 [shape = 's32[2]{0}', space=sflag, size = 0x8, scoped, tag = 'scoped memory for tpu_custom_call.1']
    #allocation6 [shape = 's32[2]{0}', space=sflag, size = 0x8, scoped, tag = 'scoped memory for tpu_custom_call.1']
    #allocation7 [shape = 'u8[2048]{0}', space=vmem, size = 0x800, scoped, tag = 'input window, operand 1, single buffered']
    #allocation8 [shape = 's32[1]{0}', space=sflag, size = 0x4, scoped, tag = 'scoped memory for tpu_custom_call.1']
    #allocation9 [shape = 'u8[2048]{0}', space=vmem, size = 0x800, scoped, tag = 'input window, operand 2, single buffered']
    #allocation10 [shape = 'u8[1024]{0}', space=vmem, size = 0x400, scoped, tag = 'output window, operand 0']
    %8 = vsyncpa [#allocation5], 0
    %s9 = scalar_lea.sflag [#allocation5], 1
    %10 = vsyncpa %s9, 0
    %11 = vsyncpa [#allocation8], 0
    %12 = vsyncpa [#allocation6], 0
    %s13 = scalar_lea.sflag [#allocation6], 1
    %14 = vsyncpa %s13, 0
    loop: start=0, step=1, limit=4
    $region2: #{tpu_custom_call.1} parent=1 // loop_pre_header
      _
    $region3: #{tpu_custom_call.1} parent=1 // loop_header
      %s16 = sphi 0, %s20
      %p17 = scmp.ge.s32.totalorder %s16, 4
      %s23 = sphi 0, %s35
      %s24 = sphi 0, %s31
      %s25 = sphi 0, %s23
      %s26 = sphi 0, %s24
      %s27 = sphi 0, %s25
      %s28 = sphi 0, %s26
      %s40 = sphi 0, %s42
      %s43 = sphi 0, %s40
      %s44 = sphi 0, %s43
      %s60 = sphi 0, %s44
      %s64 = sphi 0, %s64
      %s66 = sphi 0, %s64
      %s67 = sphi 0, %s66
      %s81 = sphi 0, %s67
      %s85 = sphi 0, %s85
      %s87 = sphi 0, %s85
      %s88 = sphi 0, %s87
      %s102 = sphi 0, %s88
      %s108 = sphi 0, %s110
      %s111 = sphi 0, %s108
      %s112 = sphi 0, %s111
      %s128 = sphi 0, %s112
    $region4: #{tpu_custom_call.1} parent=1 // loop_header_branch
      %19 = sbr.rel (%p17) target = $region8
    $region5: #{tpu_custom_call.1} parent=1 // loop_body
      %s21 = ssub.s32 %s16, 1
      %s22 = ssub.s32 %s16, 2
      %s29 = sadd.s32 1, %s24
      %p30 = scmp.ge.s32.totalorder %s29, 1
      %s31 = scalar_select %p30, 0, %s29
      %s32 = sadd.s32 1, %s23
      %s33 = scalar_select %p30, %s32, %s23
      %p34 = scmp.ge.s32.totalorder %s33, 2
      %s35 = scalar_select %p34, 0, %s33
      %s36 = ssub.s32 %s23, %s35
      %s37 = ssub.s32 %s24, %s31
      %s38 = sor.u32 %s36, %s37
      %p39 = scmp.eq.s32.totalorder %s38, 0
      %s41 = sadd.s32 %s40, 1
      %s42 = scalar_select %p39, %s40, %s41
      %p45 = pneg %p39
      %p46 = scmp.eq.s32.totalorder %s16, 1
      %p47 = por %p45, %p46
      %p48 = scmp.ne.s32.totalorder %s40, %s43
      %p49 = scmp.eq.s32.totalorder %s16, 0
      %p50 = por %p48, %p49
      %p51 = scmp.ne.s32.totalorder %s40, %s43
      %p52 = scmp.eq.s32.totalorder %s21, 1
      %p53 = por %p51, %p52
      %p54 = scmp.ne.s32.totalorder %s43, %s44
      %p55 = scmp.eq.s32.totalorder %s21, 0
      %p56 = por %p54, %p55
      %p57 = scmp.ne.s32.totalorder %s43, %s44
      %p58 = scmp.eq.s32.totalorder %s22, 1
      %p59 = por %p57, %p58
      %p61 = scmp.ne.s32.totalorder %s44, %s60
      %p62 = scmp.eq.s32.totalorder %s22, 0
      %p63 = por %p61, %p62
      %s65 = sadd.s32 %s64, 1
      %p68 = scmp.eq.s32.totalorder %s16, 1
      %p69 = scmp.ne.s32.totalorder %s64, %s66
      %p70 = scmp.eq.s32.totalorder %s16, 0
      %p71 = por %p69, %p70
      %p72 = scmp.ne.s32.totalorder %s64, %s66
      %p73 = scmp.eq.s32.totalorder %s21, 1
      %p74 = por %p72, %p73
      %p75 = scmp.ne.s32.totalorder %s66, %s67
      %p76 = scmp.eq.s32.totalorder %s21, 0
      %p77 = por %p75, %p76
      %p78 = scmp.ne.s32.totalorder %s66, %s67
      %p79 = scmp.eq.s32.totalorder %s22, 1
      %p80 = por %p78, %p79
      %p82 = scmp.ne.s32.totalorder %s67, %s81
      %p83 = scmp.eq.s32.totalorder %s22, 0
      %p84 = por %p82, %p83
      %s86 = sadd.s32 %s85, 1
      %p89 = scmp.eq.s32.totalorder %s16, 1
      %p90 = scmp.ne.s32.totalorder %s85, %s87
      %p91 = scmp.eq.s32.totalorder %s16, 0
      %p92 = por %p90, %p91
      %p93 = scmp.ne.s32.totalorder %s85, %s87
      %p94 = scmp.eq.s32.totalorder %s21, 1
      %p95 = por %p93, %p94
      %p96 = scmp.ne.s32.totalorder %s87, %s88
      %p97 = scmp.eq.s32.totalorder %s21, 0
      %p98 = por %p96, %p97
      %p99 = scmp.ne.s32.totalorder %s87, %s88
      %p100 = scmp.eq.s32.totalorder %s22, 1
      %p101 = por %p99, %p100
      %p103 = scmp.ne.s32.totalorder %s88, %s102
      %p104 = scmp.eq.s32.totalorder %s22, 0
      %p105 = por %p103, %p104
      %s106 = ssub.s32 %s23, %s35
      %p107 = scmp.eq.s32.totalorder %s106, 0
      %s109 = sadd.s32 %s108, 1
      %s110 = scalar_select %p107, %s108, %s109
      %p113 = pneg %p107
      %p114 = scmp.eq.s32.totalorder %s16, 1
      %p115 = por %p113, %p114
      %p116 = scmp.ne.s32.totalorder %s108, %s111
      %p117 = scmp.eq.s32.totalorder %s16, 0
      %p118 = por %p116, %p117
      %p119 = scmp.ne.s32.totalorder %s108, %s111
      %p120 = scmp.eq.s32.totalorder %s21, 1
      %p121 = por %p119, %p120
      %p122 = scmp.ne.s32.totalorder %s111, %s112
      %p123 = scmp.eq.s32.totalorder %s21, 0
      %p124 = por %p122, %p123
      %p125 = scmp.ne.s32.totalorder %s111, %s112
      %p126 = scmp.eq.s32.totalorder %s22, 1
      %p127 = por %p125, %p126
      %p129 = scmp.ne.s32.totalorder %s112, %s128
      %p130 = scmp.eq.s32.totalorder %s22, 0
      %p131 = por %p129, %p130
      %p132 = scmp.le.s32.totalorder 1, %s16
      %p133 = scmp.lt.s32.totalorder %s16, 3
      %p134 = pnand %p132, %p133
      %p135 = pneg %p134
      // Predicated region
      $region9: #{tpu_custom_call.1} parent=5 // pred_check
        _
      $region10: #{tpu_custom_call.1} parent=5 // pred_check_branch
        %137 = sbr.rel (%p134) target = $region12
      $region11: #{tpu_custom_call.1} parent=5 // pred_region
        %s138 = ssub.s32 %s16, 1
        // Predicated region
        $region13: #{tpu_custom_call.1} parent=11 // pred_check
          %p139 = pneg %p77
        $region14: #{tpu_custom_call.1} parent=11 // pred_check_branch
          %141 = sbr.rel (%p139) target = $region16
        $region15: #{tpu_custom_call.1} parent=11 // pred_region
          %143 = vsyncadd [#allocation8], 0
          %s145 = sshll.u32 %s1, 4
          %s146 = int_to_ptr.hbm [resolvable:$true] %s145
          %s147 = sshll.u32 [#allocation7], 4
          %s148 = int_to_ptr.vmem [resolvable:$true] %s147
          %150 = dma.hbm_to_vmem [thread:$0]  %s146, 64, %s148, [#allocation8]
        $region16: #{tpu_custom_call.1} parent=11 // pred_fallthru
          _
        // Predicated region
        $region17: #{tpu_custom_call.1} parent=11 // pred_check
          %p151 = pneg %p98
        $region18: #{tpu_custom_call.1} parent=11 // pred_check_branch
          %153 = sbr.rel (%p151) target = $region20
        $region19: #{tpu_custom_call.1} parent=11 // pred_region
          %155 = vsyncadd [#allocation8], 0
          %s157 = sshll.u32 %s2, 4
          %s158 = int_to_ptr.hbm [resolvable:$true] %s157
          %s159 = sshll.u32 [#allocation9], 4
          %s160 = int_to_ptr.vmem [resolvable:$true] %s159
          %162 = dma.hbm_to_vmem [thread:$0]  %s158, 64, %s160, [#allocation8]
        $region20: #{tpu_custom_call.1} parent=11 // pred_fallthru
          _
      $region12: #{tpu_custom_call.1} parent=5 // pred_fallthru
        _
      %p163 = scmp.lt.s32.totalorder %s16, 2
      // Predicated region
      $region21: #{tpu_custom_call.1} parent=5 // pred_check
        %p164 = pneg %p163
      $region22: #{tpu_custom_call.1} parent=5 // pred_check_branch
        %166 = sbr.rel (%p164) target = $region24
      $region23: #{tpu_custom_call.1} parent=5 // pred_region
        // Predicated region
        $region25: #{tpu_custom_call.1} parent=23 // pred_check
          %p167 = pneg %p50
        $region26: #{tpu_custom_call.1} parent=23 // pred_check_branch
          %169 = sbr.rel (%p167) target = $region28
        $region27: #{tpu_custom_call.1} parent=23 // pred_region
          %s170 = sand.u32 %s40, 1
          %s171 = scalar_lea.sflag [#allocation5], %s170
          %s172 = sand.u32 %s40, 1
          %s173 = smul.addr %s172, 16
          %s174 = scalar_lea.vmem [#allocation4], %s173
          %s175 = smul.u32 4, %s24
          %177 = vsyncadd %s171, 0
          %s178 = smul.addr %s23, 4
          %s179 = sadd.s32 %s175, %s178
          %s180 = smul.addr %s179, 4
          %s181 = scalar_lea.hbm %s0, %s180
          %s183 = sshll.u32 %s181, 4
          %s184 = int_to_ptr.hbm [resolvable:$true] %s183
          %s185 = sshll.u32 %s174, 4
          %s186 = int_to_ptr.vmem [resolvable:$true] %s185
          %188 = dma.hbm_to_vmem [thread:$0]  %s184, 256, %s186, %s171
        $region28: #{tpu_custom_call.1} parent=23 // pred_fallthru
          _
      $region24: #{tpu_custom_call.1} parent=5 // pred_fallthru
        _
      %p189 = scmp.le.s32.totalorder 1, %s16
      %p190 = scmp.lt.s32.totalorder %s16, 3
      %p191 = pnand %p189, %p190
      %p192 = pneg %p191
      // Predicated region
      $region29: #{tpu_custom_call.1} parent=5 // pred_check
        _
      $region30: #{tpu_custom_call.1} parent=5 // pred_check_branch
        %194 = sbr.rel (%p191) target = $region32
      $region31: #{tpu_custom_call.1} parent=5 // pred_region
        %s195 = ssub.s32 %s16, 1
        %s196 = sand.u32 %s43, 1
        %s197 = scalar_lea.sflag [#allocation5], %s196
        %s198 = sand.u32 %s43, 1
        %s199 = smul.addr %s198, 16
        %s200 = scalar_lea.vmem [#allocation4], %s199
        // Predicated region
        $region33: #{tpu_custom_call.1} parent=31 // pred_check
          %p201 = pneg %p56
        $region34: #{tpu_custom_call.1} parent=31 // pred_check_branch
          %203 = sbr.rel (%p201) target = $region36
        $region35: #{tpu_custom_call.1} parent=31 // pred_region
          %205 = dma.done %s197, 256
        $region36: #{tpu_custom_call.1} parent=31 // pred_fallthru
          _
        // Predicated region
        $region37: #{tpu_custom_call.1} parent=31 // pred_check
          %p206 = pneg %p77
        $region38: #{tpu_custom_call.1} parent=31 // pred_check_branch
          %208 = sbr.rel (%p206) target = $region40
        $region39: #{tpu_custom_call.1} parent=31 // pred_region
          %210 = dma.done [#allocation8], 64
        $region40: #{tpu_custom_call.1} parent=31 // pred_fallthru
          _
        // Predicated region
        $region41: #{tpu_custom_call.1} parent=31 // pred_check
          %p211 = pneg %p98
        $region42: #{tpu_custom_call.1} parent=31 // pred_check_branch
          %213 = sbr.rel (%p211) target = $region44
        $region43: #{tpu_custom_call.1} parent=31 // pred_region
          %215 = dma.done [#allocation8], 64
        $region44: #{tpu_custom_call.1} parent=31 // pred_fallthru
          _
        %s216 = sand.u32 %s43, 1
        %s217 = scalar_lea.sflag [#allocation5], %s216
        %s218 = sand.u32 %s43, 1
        %s219 = smul.addr %s218, 16
        %s220 = scalar_lea.vmem [#allocation4], %s219
        %p221 = pneg %p56
        %p222 = pneg %p53
        %p223 = pneg %p77
        %p224 = pneg %p74
        %p225 = pneg %p98
        %p226 = pneg %p95
        %p227 = pneg %p124
        %p228 = pneg %p121
        %s229 = sand.u32 %s111, 1
        %s230 = scalar_lea.sflag [#allocation6], %s229
        %s231 = sand.u32 %s111, 1
        %s232 = scalar_lea.vmem [#allocation10], %s231
        %s233 = smul.u32 4, %s26
        %p234 = scmp.eq.s32.totalorder %s26, 0
        // Predicated region
        $region45: #{tpu_custom_call.1} parent=31 // pred_check
          %p235 = pneg %p234
        $region46: #{tpu_custom_call.1} parent=31 // pred_check_branch
          %237 = sbr.rel (%p235) target = $region48
        $region47: #{tpu_custom_call.1} parent=31 // pred_region
          %238 = vst [vmem:[#allocation2] sm:$0xf] 0.0
          %239 = vst [vmem:[#allocation3] sm:$0xf] -inf
        $region48: #{tpu_custom_call.1} parent=31 // pred_fallthru
          _
        %v240 = vld [vmem:[%s200] sm:$0xf]
        %v241 = vld [vmem:[%s200 + $0x4] sm:$0xf]
        %v242 = vadd.f32 %v240, %v241
        %v243 = vmax.f32 %v240, %v241
        %v244 = vld [vmem:[%s200 + $0x8] sm:$0xf]
        %v245 = vadd.f32 %v242, %v244
        %v246 = vmax.f32 %v243, %v244
        %v247 = vld [vmem:[%s200 + $0xc] sm:$0xf]
        %v248 = vadd.f32 %v245, %v247
        %v249 = vmax.f32 %v246, %v247
        %v250 = vld [vmem:[#allocation2] sm:$0xf]
        %v251 = vadd.f32 %v250, %v248
        %252 = vst [vmem:[#allocation2] sm:$0xf] %v251
        %v253 = vld [vmem:[#allocation3] sm:$0xf]
        %v254 = vmax.f32 %v253, %v249
        %255 = vst [vmem:[#allocation3] sm:$0xf] %v254
        // Predicated region
        $region49: #{tpu_custom_call.1} parent=31 // pred_check
          %p256 = pneg %p234
        $region50: #{tpu_custom_call.1} parent=31 // pred_check_branch
          %258 = sbr.rel (%p256) target = $region52
        $region51: #{tpu_custom_call.1} parent=31 // pred_region
          %v259 = vld [vmem:[#allocation2] sm:$0xf]
          %vm260 = vcmask 1043456
          %v261 = vsel %vm260, %v259, 0.0
          %262 = vadd.xlane.f32.xlu0 %v261
          %v263 = vpop.xlane.xlu0 %262
          %v264 = vmul.f32 %v263, 0.001953125
          %v265 = vld [vmem:[#allocation3] sm:$0xf]
          %v266 = vsel %vm260, %v265, -inf
          %267 = vmax.xlane.f32.xlu0 %v266
          %v268 = vpop.xlane.xlu0 %267
          %v270 = vlaneseq
          %v271 = vand.u32 %v270, 127
          %v272 = vperm.slane %v264, %v271
          %v275 = vperm.slane %v268, %v271
          %vm277 = vcmask 1040384
          %v278 = vsel %vm277, %v272, %v275
          %v279 = vld [vmem:[#allocation7] sm:$0xf]
          %v280 = vld [vmem:[#allocation9] sm:$0xf]
          %vm281 = vcmask 31744
          %v283 = vsel %vm281, %v278, 0
          %v286 = vsel %vm260, %v279, 0
          %288 = vmatpush.msra.mxu0 0.0
          %289 = vmatpush.msra.mxu0 0.0
          %290 = vmatpush.msra.mxu0 0.0
          %291 = vmatpush.msra.mxu0 0.0
          %292 = vmatpush.msra.mxu0 0.0
          %293 = vmatpush.msra.mxu0 0.0
          %294 = vmatpush.msra.mxu0 0.0
          %295 = vmatpush.msra.mxu0 0.0
          %296 = vmatpush.msra.mxu0 0.0
          %297 = vmatpush.msra.mxu0 0.0
          %298 = vmatpush.msra.mxu0 0.0
          %299 = vmatpush.msra.mxu0 0.0
          %300 = vmatpush.msra.mxu0 0.0
          %301 = vmatpush.msra.mxu0 0.0
          %302 = vmatpush.msra.mxu0 0.0
          %303 = vmatpush.msra.mxu0 %v286
          %304 = vmatmul.f32.gmra.mxu0 %v283
          %v305 = vpop.f32.mrf.mxu0
          %v306 = vadd.f32 0.0, %v305
          %307 = vdwg.mxu0
          %v308 = vmax.f32 %v306, 0.0
          %v310 = vsel %vm281, %v308, 0
          %v313 = vsel %vm260, %v280, 0
          %315 = vmatpush.msra.mxu0 0.0
          %316 = vmatpush.msra.mxu0 0.0
          %317 = vmatpush.msra.mxu0 0.0
          %318 = vmatpush.msra.mxu0 0.0
          %319 = vmatpush.msra.mxu0 0.0
          %320 = vmatpush.msra.mxu0 0.0
          %321 = vmatpush.msra.mxu0 0.0
          %322 = vmatpush.msra.mxu0 0.0
          %323 = vmatpush.msra.mxu0 0.0
          %324 = vmatpush.msra.mxu0 0.0
          %325 = vmatpush.msra.mxu0 0.0
          %326 = vmatpush.msra.mxu0 0.0
          %327 = vmatpush.msra.mxu0 0.0
          %328 = vmatpush.msra.mxu0 0.0
          %329 = vmatpush.msra.mxu0 0.0
          %330 = vmatpush.msra.mxu0 %v313
          %331 = vmatmul.f32.gmra.mxu0 %v310
          %v332 = vpop.f32.mrf.mxu0
          %v333 = vadd.f32 0.0, %v332
          %334 = vdwg.mxu0
          %v336 = vrot.slane %v333, 1
          %v338 = vadd.f32 %v333, %v336
          %v339 = vxor.u32 %v338, 2147483648
          %v340 = vmul.f32 %v339, 1.442695
          %v341 = vpow.pop %v340
          %v342 = vadd.f32 %v341, 1.0
          %v343 = vrcp.pop %v342
          %v344 = vmul.f32 %v342, %v343
          %v345 = vsub.f32 1.0, %v344
          %v346 = vmul.f32 %v343, %v345
          %v347 = vadd.f32 %v343, %v346
          %vm348 = vweird.f32 %v342
          %vm349 = vweird.f32 %v343
          %vm350 = vmor %vm348, %vm349
          %v351 = vsel %vm350, %v343, %v347
          %v352 = vand.u32 2147483647, %v342
          %vm353 = vcmp.eq.f32.partialorder %v352, 8.507059e+37
          %v354 = vand.u32 %v342, 2147483648
          %v355 = vor.u32 1.1754944e-38, %v354
          %v356 = vsel %vm353, %v355, %v351
          %v357 = vmul.f32 1.0, %v356
          %vm358 = vcmask 24576
          %359 = vst.msk [vmem:[%s232] sm:$0x1] %vm358, %v357
        $region52: #{tpu_custom_call.1} parent=31 // pred_fallthru
          _
        %s360 = sand.u32 %s111, 1
        %s361 = scalar_lea.sflag [#allocation6], %s360
        %s362 = sand.u32 %s111, 1
        %s363 = scalar_lea.vmem [#allocation10], %s362
        // Predicated region
        $region53: #{tpu_custom_call.1} parent=31 // pred_check
          %p364 = pneg %p121
        $region54: #{tpu_custom_call.1} parent=31 // pred_check_branch
          %366 = sbr.rel (%p364) target = $region56
        $region55: #{tpu_custom_call.1} parent=31 // pred_region
          %368 = vsyncadd %s361, 0
          %s369 = scalar_lea.hbm %s3, %s25
          %s371 = sshll.u32 %s363, 4
          %s372 = int_to_ptr.vmem [resolvable:$true] %s371
          %s373 = sshll.u32 %s369, 4
          %s374 = int_to_ptr.hbm [resolvable:$true] %s373
          %376 = dma.vmem_to_hbm [thread:$0]  %s372, 16, %s374, %s361
        $region56: #{tpu_custom_call.1} parent=31 // pred_fallthru
          _
      $region32: #{tpu_custom_call.1} parent=5 // pred_fallthru
        _
      %p377 = scmp.le.s32.totalorder 2, %s16
      // Predicated region
      $region57: #{tpu_custom_call.1} parent=5 // pred_check
        %p378 = pneg %p377
      $region58: #{tpu_custom_call.1} parent=5 // pred_check_branch
        %380 = sbr.rel (%p378) target = $region60
      $region59: #{tpu_custom_call.1} parent=5 // pred_region
        %s381 = ssub.s32 %s16, 2
        // Predicated region
        $region61: #{tpu_custom_call.1} parent=59 // pred_check
          %p382 = pneg %p127
        $region62: #{tpu_custom_call.1} parent=59 // pred_check_branch
          %384 = sbr.rel (%p382) target = $region64
        $region63: #{tpu_custom_call.1} parent=59 // pred_region
          %s385 = sand.u32 %s112, 1
          %s386 = scalar_lea.sflag [#allocation6], %s385
          %s387 = sand.u32 %s112, 1
          %s388 = scalar_lea.vmem [#allocation10], %s387
          %390 = dma.done %s386, 16
        $region64: #{tpu_custom_call.1} parent=59 // pred_fallthru
          _
      $region60: #{tpu_custom_call.1} parent=5 // pred_fallthru
        _
    $region6: #{tpu_custom_call.1} parent=1 // loop_footer
      %s20 = sadd.s32 1, %s16
    $region7: #{tpu_custom_call.1} parent=1 // loop_footer_branch
      %15 = sbr.rel target = $region3
    $region8: #{tpu_custom_call.1} parent=1 // loop_exit
      _
    %391 = vsyncpa [#allocation5], 1
    %s392 = scalar_lea.sflag [#allocation5], 1
    %393 = vsyncpa %s392, 1
    %394 = vsyncpa [#allocation8], 1
    %395 = vsyncpa [#allocation6], 1
    %s396 = scalar_lea.sflag [#allocation6], 1
    %397 = vsyncpa %s396, 1

</llo_original>
